<compile_context>
chip_gen: v5e
topology: v5e:2x2
jax: 0.10.0
libtpu: 0.0.40
codegen_flags: <defaults>
</compile_context>

<pallas_src>
import functools

import jax
import jax.numpy as jnp
from jax import lax
from jax.experimental import pallas as pl
from jax.experimental.pallas import tpu as pltpu


def _t5_attention_kernel(h_ref, wq_ref, wk_ref, wv_ref, wo_ref, pb_ref,
                         o_ref, acc_ref, *, heads_per_block, inv_temperature):
    """One grid step = one (batch element, head group).

    h_ref  : (S, D)          bf16  hidden states for this batch element
    w*_ref : (HB, D, d_kv)   bf16  per-head q/k/v projection columns
    wo_ref : (HB, d_kv, D)   bf16  per-head rows of the output projection
    pb_ref : (HB, S, S)      f32   position bias (already scaled by 1/temp)
    o_ref  : (S, D)          f32   output block (resident across head axis)
    acc_ref: (S, D)          f32   VMEM accumulator
    """
    g = pl.program_id(1)

    @pl.when(g == 0)
    def _init():
        acc_ref[...] = jnp.zeros_like(acc_ref)

    h = h_ref[...]                                            # (S, D) bf16

    for i in range(heads_per_block):                          # static loop
        wq = wq_ref[i]                                        # (D, d_kv)
        wk = wk_ref[i]
        wv = wv_ref[i]
        wo = wo_ref[i]                                        # (d_kv, D)

        # Projections (T5: no bias, no 1/sqrt(d) scaling). Temperature is
        # folded into q; the position bias was pre-scaled in the wrapper.
        q32 = jnp.dot(h, wq, preferred_element_type=jnp.float32)
        if inv_temperature != 1.0:
            q32 = q32 * jnp.float32(inv_temperature)
        q = q32.astype(jnp.bfloat16)                          # (S, d_kv)
        k = jnp.dot(h, wk, preferred_element_type=jnp.float32
                    ).astype(jnp.bfloat16)                    # (S, d_kv)
        v = jnp.dot(h, wv, preferred_element_type=jnp.float32
                    ).astype(jnp.bfloat16)                    # (S, d_kv)

        # q @ k^T without materializing a transpose (contract last dims).
        scores = lax.dot_general(
            q, k, dimension_numbers=(((1,), (1,)), ((), ())),
            preferred_element_type=jnp.float32)               # (S, S) f32
        scores = scores + pb_ref[i]

        # Numerically stable softmax, f32 math, reciprocal on the EUP.
        m = jnp.max(scores, axis=-1, keepdims=True)
        e = jnp.exp(scores - m)
        denom = jnp.sum(e, axis=-1, keepdims=True)
        attn = e * pl.reciprocal(denom, approx=True)          # (S, S) f32

        ctx = jnp.dot(attn.astype(jnp.bfloat16), v,
                      preferred_element_type=jnp.float32)     # (S, d_kv)

        # Accumulate the output projection per head: lane-dense (S, D)
        # update, no per-head lane slicing and no final concat.
        acc_ref[...] += jnp.dot(ctx.astype(jnp.bfloat16), wo,
                                preferred_element_type=jnp.float32)

    @pl.when(g == pl.num_programs(1) - 1)
    def _finalize():
        o_ref[...] = acc_ref[...].astype(o_ref.dtype)


def t5_attention(hidden_states, wq, wk, wv, wo, position_bias, n_heads, d_kv,
                 temperature=1.0, heads_per_block=None):
    """Returns (attn_output, present_key_value_state=None, position_bias)."""
    B, S, D = hidden_states.shape
    inner = n_heads * d_kv
    assert wq.shape == (D, inner) and wk.shape == (D, inner)
    assert wv.shape == (D, inner) and wo.shape == (inner, D)
    assert position_bias.shape == (1, n_heads, S, S)

    if heads_per_block is None:
        # Group heads so the attention matmul widths approach 128 lanes.
        heads_per_block = 1
        for cand in range(min(n_heads, max(1, 128 // max(d_kv, 1))), 0, -1):
            if n_heads % cand == 0:
                heads_per_block = cand
                break
    assert n_heads % heads_per_block == 0
    HB = heads_per_block
    n_groups = n_heads // HB

    inv_t = 1.0 / float(temperature)

    # One-time layout / dtype prep (outside the kernel hot loop):
    #  - per-head leading axis on the weights so head slicing is a major-dim
    #    BlockSpec index (no sub-128-lane blocks),
    #  - bf16 matmul inputs (MXU native), softmax stays f32,
    #  - position bias pre-scaled by 1/temperature (temperature is folded
    #    into q inside the kernel, so the bias must be scaled identically).
    h_bf16 = hidden_states.astype(jnp.bfloat16)
    wq_r = wq.reshape(D, n_heads, d_kv).transpose(1, 0, 2).astype(jnp.bfloat16)
    wk_r = wk.reshape(D, n_heads, d_kv).transpose(1, 0, 2).astype(jnp.bfloat16)
    wv_r = wv.reshape(D, n_heads, d_kv).transpose(1, 0, 2).astype(jnp.bfloat16)
    wo_r = wo.reshape(n_heads, d_kv, D).astype(jnp.bfloat16)
    pb_in = position_bias.astype(jnp.float32)
    if temperature != 1.0:
        pb_in = pb_in * jnp.float32(inv_t)

    kernel = functools.partial(_t5_attention_kernel,
                               heads_per_block=HB,
                               inv_temperature=inv_t)

    # Advisory cost estimate + VMEM budget sized to the per-step working set
    # (double-buffered inputs/outputs + accumulator), capped at 64 MiB so the
    # same config also fits v7x's physical VMEM.
    flops = B * (8 * S * D * inner + 4 * S * S * inner)
    transcendentals = B * n_heads * (S * S + S)
    bytes_accessed = (B * S * D * 2 + 4 * D * inner * 2
                      + n_heads * S * S * 4 + B * S * D * 4)
    block_bytes = (S * D * 2 + 4 * HB * D * d_kv * 2
                   + HB * S * S * 4 + S * D * 4)
    vmem_limit = int(min(64 * 1024 * 1024,
                         max(8 * 1024 * 1024, 4 * block_bytes)))

    attn_output = pl.pallas_call(
        kernel,
        out_shape=jax.ShapeDtypeStruct((B, S, D), jnp.float32),
        grid_spec=pltpu.PrefetchScalarGridSpec(
            num_scalar_prefetch=0,
            grid=(B, n_groups),
            in_specs=[
                pl.BlockSpec((pl.Squeezed(), S, D),
                             lambda b, g: (b, 0, 0)),            # hidden
                pl.BlockSpec((HB, D, d_kv), lambda b, g: (g, 0, 0)),   # Wq
                pl.BlockSpec((HB, D, d_kv), lambda b, g: (g, 0, 0)),   # Wk
                pl.BlockSpec((HB, D, d_kv), lambda b, g: (g, 0, 0)),   # Wv
                pl.BlockSpec((HB, d_kv, D), lambda b, g: (g, 0, 0)),   # Wo
                pl.BlockSpec((pl.Squeezed(), HB, S, S),
                             lambda b, g: (0, g, 0, 0)),         # pos bias
            ],
            out_specs=pl.BlockSpec((pl.Squeezed(), S, D),
                                   lambda b, g: (b, 0, 0)),
            scratch_shapes=[pltpu.VMEM((S, D), jnp.float32)],
        ),
        compiler_params=pltpu.CompilerParams(
            dimension_semantics=("parallel", "arbitrary"),
            vmem_limit_bytes=vmem_limit),
        cost_estimate=pl.CostEstimate(flops=flops,
                                      transcendentals=transcendentals,
                                      bytes_accessed=bytes_accessed),
    )(h_bf16, wq_r, wk_r, wv_r, wo_r, pb_in)

    # present_key_value_state is None (not a decoder / use_cache=False).
    return attn_output, None, position_bias


def t5_attention_reference(hidden_states, wq, wk, wv, wo, position_bias,
                           n_heads, d_kv, temperature=1.0):
    """Pure-JAX f32 reference mirroring the PyTorch forward pass."""
    B, S, D = hidden_states.shape
    q = hidden_states @ wq
    k = hidden_states @ wk
    v = hidden_states @ wv
    shape = lambda x: x.reshape(B, S, n_heads, d_kv).transpose(0, 2, 1, 3)
    q, k, v = shape(q), shape(k), shape(v)                 # (B, H, S, d_kv)
    scores = jnp.einsum("bhqd,bhkd->bhqk", q, k)           # no 1/sqrt(d) in T5
    scores = scores + position_bias
    attn_w = jax.nn.softmax(scores / temperature, axis=-1)
    ctx = jnp.einsum("bhqk,bhkd->bhqd", attn_w, v)
    ctx = ctx.transpose(0, 2, 1, 3).reshape(B, S, n_heads * d_kv)
    return ctx @ wo


if __name__ == "__main__":
    # Small T5-ish config
    B, S, D = 2, 8, 32          # batch, seq, d_model
    H, DK = 4, 8                # n_heads, key_value_proj_dim
    INNER = H * DK
    TEMPERATURE = 2.0           # exercises the temperature / bias-scaling fold

    key = jax.random.PRNGKey(0)
    kx, kq, kk, kv, ko, kb = jax.random.split(key, 6)
    hidden = jax.random.normal(kx, (B, S, D), dtype=jnp.float32)
    wq = jax.random.normal(kq, (D, INNER), dtype=jnp.float32) * 0.05
    wk = jax.random.normal(kk, (D, INNER), dtype=jnp.float32) * 0.05
    wv = jax.random.normal(kv, (D, INNER), dtype=jnp.float32) * 0.05
    wo = jax.random.normal(ko, (INNER, D), dtype=jnp.float32) * 0.05

    # Non-zero position bias exercises the bias-add path (stands in for a
    # user-supplied position_bias / attention mask).
    position_bias = jax.random.normal(kb, (1, H, S, S), dtype=jnp.float32) * 0.5
    # TODO(synk): compute_bias (relative attention bias buckets) not
    # implemented; this kernel covers the path where position_bias is given
    # or zeros (has_relative_attention_bias=False).

    out, present, pb = t5_attention(hidden, wq, wk, wv, wo, position_bias,
                                    n_heads=H, d_kv=DK,
                                    temperature=TEMPERATURE,
                                    heads_per_block=2)
    out = jax.block_until_ready(out)

    ref = t5_attention_reference(hidden, wq, wk, wv, wo, position_bias,
                                 n_heads=H, d_kv=DK, temperature=TEMPERATURE)
    assert out.shape == (B, S, D)
    assert present is None
    assert pb.shape == position_bias.shape
    # bf16 matmul inputs with f32 accumulation -> modest tolerance vs f32 ref.
    assert jnp.allclose(out, ref, atol=2e-2, rtol=2e-2), "mismatch vs reference"

    print("KERNEL_OK")
</pallas_src>

<mosaic_0001>
module attributes {stable_mosaic.version = 11 : i64} {
  func.func @_t5_attention_kernel(%arg0: i32, %arg1: i32, %arg2: memref<1x8x32xbf16, #tpu.memory_space<vmem>>, %arg3: memref<2x32x8xbf16, #tpu.memory_space<vmem>>, %arg4: memref<2x32x8xbf16, #tpu.memory_space<vmem>>, %arg5: memref<2x32x8xbf16, #tpu.memory_space<vmem>>, %arg6: memref<2x8x32xbf16, #tpu.memory_space<vmem>>, %arg7: memref<1x2x8x8xf32, #tpu.memory_space<vmem>>, %arg8: memref<1x8x32xf32, #tpu.memory_space<vmem>>, %arg9: memref<8x32xf32, #tpu.memory_space<vmem>>) attributes {dimension_semantics = [#tpu.dimension_semantics<parallel>, #tpu.dimension_semantics<arbitrary>], iteration_bounds = array<i64: 2, 2>, scalar_prefetch = 0 : i64, scratch_operands = 1 : i64, tpu.core_type = #tpu.core_type<tc>, window_params = [{transform_indices = @transform_0, window_bounds = array<i64: 1, 8, 32>}, {transform_indices = @transform_1, window_bounds = array<i64: 2, 32, 8>}, {transform_indices = @transform_2, window_bounds = array<i64: 2, 32, 8>}, {transform_indices = @transform_3, window_bounds = array<i64: 2, 32, 8>}, {transform_indices = @transform_4, window_bounds = array<i64: 2, 8, 32>}, {transform_indices = @transform_5, window_bounds = array<i64: 1, 2, 8, 8>}, {transform_indices = @transform_6, window_bounds = array<i64: 1, 8, 32>}]} {
    %c0_i32 = arith.constant 0 : i32
    %0 = arith.cmpi eq, %arg1, %c0_i32 : i32
    %1 = arith.extui %0 : i1 to i32
    %c0_i32_0 = arith.constant 0 : i32
    %2 = arith.cmpi ne, %1, %c0_i32_0 : i32
    scf.if %2 {
      %cst_60 = arith.constant 0.000000e+00 : f32
      %82 = vector.broadcast %cst_60 : f32 to vector<8x32xf32>
      %c0_61 = arith.constant 0 : index
      %c0_62 = arith.constant 0 : index
      %83 = vector.load %arg9[%c0_61, %c0_62] : memref<8x32xf32, #tpu.memory_space<vmem>>, vector<8x32xf32>
      tpu.vector_store %arg9[%c0_61, %c0_62], %82 {strides = array<i32>} : memref<8x32xf32, #tpu.memory_space<vmem>>, vector<8x32xf32>,
    } else {
    }
    %c0 = arith.constant 0 : index
    %c0_1 = arith.constant 0 : index
    %c0_2 = arith.constant 0 : index
    %3 = vector.load %arg2[%c0, %c0_1, %c0_2] : memref<1x8x32xbf16, #tpu.memory_space<vmem>>, vector<1x8x32xbf16>
    %4 = vector.shape_cast %3 : vector<1x8x32xbf16> to vector<8x32xbf16>
    %c0_3 = arith.constant 0 : index
    %c0_4 = arith.constant 0 : index
    %c0_5 = arith.constant 0 : index
    %5 = vector.load %arg3[%c0_3, %c0_4, %c0_5] : memref<2x32x8xbf16, #tpu.memory_space<vmem>>, vector<1x32x8xbf16>
    %6 = vector.shape_cast %5 : vector<1x32x8xbf16> to vector<32x8xbf16>
    %c0_6 = arith.constant 0 : index
    %c0_7 = arith.constant 0 : index
    %c0_8 = arith.constant 0 : index
    %7 = vector.load %arg4[%c0_6, %c0_7, %c0_8] : memref<2x32x8xbf16, #tpu.memory_space<vmem>>, vector<1x32x8xbf16>
    %8 = vector.shape_cast %7 : vector<1x32x8xbf16> to vector<32x8xbf16>
    %c0_9 = arith.constant 0 : index
    %c0_10 = arith.constant 0 : index
    %c0_11 = arith.constant 0 : index
    %9 = vector.load %arg5[%c0_9, %c0_10, %c0_11] : memref<2x32x8xbf16, #tpu.memory_space<vmem>>, vector<1x32x8xbf16>
    %10 = vector.shape_cast %9 : vector<1x32x8xbf16> to vector<32x8xbf16>
    %c0_12 = arith.constant 0 : index
    %c0_13 = arith.constant 0 : index
    %c0_14 = arith.constant 0 : index
    %11 = vector.load %arg6[%c0_12, %c0_13, %c0_14] : memref<2x8x32xbf16, #tpu.memory_space<vmem>>, vector<1x8x32xbf16>
    %12 = vector.shape_cast %11 : vector<1x8x32xbf16> to vector<8x32xbf16>
    %cst = arith.constant dense<0.000000e+00> : vector<8x8xf32>
    %13 = tpu.matmul %4, %6, %cst {dimension_numbers = #tpu.dot_dimension_numbers<[1], [0], [0], [1], [0, 0, 1, 1], [], []>} : vector<8x32xbf16>, vector<32x8xbf16>, vector<8x8xf32> -> vector<8x8xf32>
    %cst_15 = arith.constant 5.000000e-01 : f32
    %14 = vector.broadcast %cst_15 : f32 to vector<8x8xf32>
    %15 = arith.mulf %13, %14 : vector<8x8xf32>
    %16 = arith.truncf %15 : vector<8x8xf32> to vector<8x8xbf16>
    %cst_16 = arith.constant dense<0.000000e+00> : vector<8x8xf32>
    %17 = tpu.matmul %4, %8, %cst_16 {dimension_numbers = #tpu.dot_dimension_numbers<[1], [0], [0], [1], [0, 0, 1, 1], [], []>} : vector<8x32xbf16>, vector<32x8xbf16>, vector<8x8xf32> -> vector<8x8xf32>
    %18 = arith.truncf %17 : vector<8x8xf32> to vector<8x8xbf16>
    %cst_17 = arith.constant dense<0.000000e+00> : vector<8x8xf32>
    %19 = tpu.matmul %4, %10, %cst_17 {dimension_numbers = #tpu.dot_dimension_numbers<[1], [0], [0], [1], [0, 0, 1, 1], [], []>} : vector<8x32xbf16>, vector<32x8xbf16>, vector<8x8xf32> -> vector<8x8xf32>
    %20 = arith.truncf %19 : vector<8x8xf32> to vector<8x8xbf16>
    %cst_18 = arith.constant dense<0.000000e+00> : vector<8x8xf32>
    %21 = tpu.matmul %16, %18, %cst_18 {dimension_numbers = #tpu.dot_dimension_numbers<[1], [1], [0], [0], [0, 0, 1, 0], [], []>} : vector<8x8xbf16>, vector<8x8xbf16>, vector<8x8xf32> -> vector<8x8xf32>
    %c0_19 = arith.constant 0 : index
    %c0_20 = arith.constant 0 : index
    %c0_21 = arith.constant 0 : index
    %c0_22 = arith.constant 0 : index
    %22 = vector.load %arg7[%c0_19, %c0_20, %c0_21, %c0_22] : memref<1x2x8x8xf32, #tpu.memory_space<vmem>>, vector<1x1x8x8xf32>
    %23 = vector.shape_cast %22 : vector<1x1x8x8xf32> to vector<8x8xf32>
    %24 = arith.addf %21, %23 : vector<8x8xf32>
    %cst_23 = arith.constant dense<0xFF800000> : vector<8xf32>
    %25 = vector.multi_reduction <maximumf>, %24, %cst_23 [1] : vector<8x8xf32> to vector<8xf32>
    %26 = vector.shape_cast %25 : vector<8xf32> to vector<8x1xf32>
    %27 = vector.broadcast %26 : vector<8x1xf32> to vector<8x8xf32>
    %28 = arith.subf %24, %27 : vector<8x8xf32>
    %29 = math.exp %28 : vector<8x8xf32>
    %cst_24 = arith.constant dense<0.000000e+00> : vector<8xf32>
    %30 = vector.multi_reduction <add>, %29, %cst_24 [1] : vector<8x8xf32> to vector<8xf32>
    %31 = vector.shape_cast %30 : vector<8xf32> to vector<8x1xf32>
    %32 = tpu.reciprocal %31 {approx = true} : vector<8x1xf32> -> vector<8x1xf32>
    %33 = vector.broadcast %32 : vector<8x1xf32> to vector<8x8xf32>
    %34 = arith.mulf %29, %33 : vector<8x8xf32>
    %35 = arith.truncf %34 : vector<8x8xf32> to vector<8x8xbf16>
    %cst_25 = arith.constant dense<0.000000e+00> : vector<8x8xf32>
    %36 = tpu.matmul %35, %20, %cst_25 {dimension_numbers = #tpu.dot_dimension_numbers<[1], [0], [0], [1], [0, 0, 1, 1], [], []>} : vector<8x8xbf16>, vector<8x8xbf16>, vector<8x8xf32> -> vector<8x8xf32>
    %c0_26 = arith.constant 0 : index
    %c0_27 = arith.constant 0 : index
    %37 = vector.load %arg9[%c0_26, %c0_27] : memref<8x32xf32, #tpu.memory_space<vmem>>, vector<8x32xf32>
    %38 = arith.truncf %36 : vector<8x8xf32> to vector<8x8xbf16>
    %cst_28 = arith.constant dense<0.000000e+00> : vector<8x32xf32>
    %39 = tpu.matmul %38, %12, %cst_28 {dimension_numbers = #tpu.dot_dimension_numbers<[1], [0], [0], [1], [0, 0, 1, 1], [], []>} : vector<8x8xbf16>, vector<8x32xbf16>, vector<8x32xf32> -> vector<8x32xf32>
    %40 = arith.addf %37, %39 : vector<8x32xf32>
    %c0_29 = arith.constant 0 : index
    %c0_30 = arith.constant 0 : index
    %41 = vector.load %arg9[%c0_29, %c0_30] : memref<8x32xf32, #tpu.memory_space<vmem>>, vector<8x32xf32>
    tpu.vector_store %arg9[%c0_29, %c0_30], %40 {strides = array<i32>} : memref<8x32xf32, #tpu.memory_space<vmem>>, vector<8x32xf32>,
    %c1 = arith.constant 1 : index
    %c0_31 = arith.constant 0 : index
    %c0_32 = arith.constant 0 : index
    %42 = vector.load %arg3[%c1, %c0_31, %c0_32] : memref<2x32x8xbf16, #tpu.memory_space<vmem>>, vector<1x32x8xbf16>
    %43 = vector.shape_cast %42 : vector<1x32x8xbf16> to vector<32x8xbf16>
    %c1_33 = arith.constant 1 : index
    %c0_34 = arith.constant 0 : index
    %c0_35 = arith.constant 0 : index
    %44 = vector.load %arg4[%c1_33, %c0_34, %c0_35] : memref<2x32x8xbf16, #tpu.memory_space<vmem>>, vector<1x32x8xbf16>
    %45 = vector.shape_cast %44 : vector<1x32x8xbf16> to vector<32x8xbf16>
    %c1_36 = arith.constant 1 : index
    %c0_37 = arith.constant 0 : index
    %c0_38 = arith.constant 0 : index
    %46 = vector.load %arg5[%c1_36, %c0_37, %c0_38] : memref<2x32x8xbf16, #tpu.memory_space<vmem>>, vector<1x32x8xbf16>
    %47 = vector.shape_cast %46 : vector<1x32x8xbf16> to vector<32x8xbf16>
    %c1_39 = arith.constant 1 : index
    %c0_40 = arith.constant 0 : index
    %c0_41 = arith.constant 0 : index
    %48 = vector.load %arg6[%c1_39, %c0_40, %c0_41] : memref<2x8x32xbf16, #tpu.memory_space<vmem>>, vector<1x8x32xbf16>
    %49 = vector.shape_cast %48 : vector<1x8x32xbf16> to vector<8x32xbf16>
    %cst_42 = arith.constant dense<0.000000e+00> : vector<8x8xf32>
    %50 = tpu.matmul %4, %43, %cst_42 {dimension_numbers = #tpu.dot_dimension_numbers<[1], [0], [0], [1], [0, 0, 1, 1], [], []>} : vector<8x32xbf16>, vector<32x8xbf16>, vector<8x8xf32> -> vector<8x8xf32>
    %cst_43 = arith.constant 5.000000e-01 : f32
    %51 = vector.broadcast %cst_43 : f32 to vector<8x8xf32>
    %52 = arith.mulf %50, %51 : vector<8x8xf32>
    %53 = arith.truncf %52 : vector<8x8xf32> to vector<8x8xbf16>
    %cst_44 = arith.constant dense<0.000000e+00> : vector<8x8xf32>
    %54 = tpu.matmul %4, %45, %cst_44 {dimension_numbers = #tpu.dot_dimension_numbers<[1], [0], [0], [1], [0, 0, 1, 1], [], []>} : vector<8x32xbf16>, vector<32x8xbf16>, vector<8x8xf32> -> vector<8x8xf32>
    %55 = arith.truncf %54 : vector<8x8xf32> to vector<8x8xbf16>
    %cst_45 = arith.constant dense<0.000000e+00> : vector<8x8xf32>
    %56 = tpu.matmul %4, %47, %cst_45 {dimension_numbers = #tpu.dot_dimension_numbers<[1], [0], [0], [1], [0, 0, 1, 1], [], []>} : vector<8x32xbf16>, vector<32x8xbf16>, vector<8x8xf32> -> vector<8x8xf32>
    %57 = arith.truncf %56 : vector<8x8xf32> to vector<8x8xbf16>
    %cst_46 = arith.constant dense<0.000000e+00> : vector<8x8xf32>
    %58 = tpu.matmul %53, %55, %cst_46 {dimension_numbers = #tpu.dot_dimension_numbers<[1], [1], [0], [0], [0, 0, 1, 0], [], []>} : vector<8x8xbf16>, vector<8x8xbf16>, vector<8x8xf32> -> vector<8x8xf32>
    %c0_47 = arith.constant 0 : index
    %c1_48 = arith.constant 1 : index
    %c0_49 = arith.constant 0 : index
    %c0_50 = arith.constant 0 : index
    %59 = vector.load %arg7[%c0_47, %c1_48, %c0_49, %c0_50] : memref<1x2x8x8xf32, #tpu.memory_space<vmem>>, vector<1x1x8x8xf32>
    %60 = vector.shape_cast %59 : vector<1x1x8x8xf32> to vector<8x8xf32>
    %61 = arith.addf %58, %60 : vector<8x8xf32>
    %cst_51 = arith.constant dense<0xFF800000> : vector<8xf32>
    %62 = vector.multi_reduction <maximumf>, %61, %cst_51 [1] : vector<8x8xf32> to vector<8xf32>
    %63 = vector.shape_cast %62 : vector<8xf32> to vector<8x1xf32>
    %64 = vector.broadcast %63 : vector<8x1xf32> to vector<8x8xf32>
    %65 = arith.subf %61, %64 : vector<8x8xf32>
    %66 = math.exp %65 : vector<8x8xf32>
    %cst_52 = arith.constant dense<0.000000e+00> : vector<8xf32>
    %67 = vector.multi_reduction <add>, %66, %cst_52 [1] : vector<8x8xf32> to vector<8xf32>
    %68 = vector.shape_cast %67 : vector<8xf32> to vector<8x1xf32>
    %69 = tpu.reciprocal %68 {approx = true} : vector<8x1xf32> -> vector<8x1xf32>
    %70 = vector.broadcast %69 : vector<8x1xf32> to vector<8x8xf32>
    %71 = arith.mulf %66, %70 : vector<8x8xf32>
    %72 = arith.truncf %71 : vector<8x8xf32> to vector<8x8xbf16>
    %cst_53 = arith.constant dense<0.000000e+00> : vector<8x8xf32>
    %73 = tpu.matmul %72, %57, %cst_53 {dimension_numbers = #tpu.dot_dimension_numbers<[1], [0], [0], [1], [0, 0, 1, 1], [], []>} : vector<8x8xbf16>, vector<8x8xbf16>, vector<8x8xf32> -> vector<8x8xf32>
    %c0_54 = arith.constant 0 : index
    %c0_55 = arith.constant 0 : index
    %74 = vector.load %arg9[%c0_54, %c0_55] : memref<8x32xf32, #tpu.memory_space<vmem>>, vector<8x32xf32>
    %75 = arith.truncf %73 : vector<8x8xf32> to vector<8x8xbf16>
    %cst_56 = arith.constant dense<0.000000e+00> : vector<8x32xf32>
    %76 = tpu.matmul %75, %49, %cst_56 {dimension_numbers = #tpu.dot_dimension_numbers<[1], [0], [0], [1], [0, 0, 1, 1], [], []>} : vector<8x8xbf16>, vector<8x32xbf16>, vector<8x32xf32> -> vector<8x32xf32>
    %77 = arith.addf %74, %76 : vector<8x32xf32>
    %c0_57 = arith.constant 0 : index
    %c0_58 = arith.constant 0 : index
    %78 = vector.load %arg9[%c0_57, %c0_58] : memref<8x32xf32, #tpu.memory_space<vmem>>, vector<8x32xf32>
    tpu.vector_store %arg9[%c0_57, %c0_58], %77 {strides = array<i32>} : memref<8x32xf32, #tpu.memory_space<vmem>>, vector<8x32xf32>,
    %c1_i32 = arith.constant 1 : i32
    %79 = arith.cmpi eq, %arg1, %c1_i32 : i32
    %80 = arith.extui %79 : i1 to i32
    %c0_i32_59 = arith.constant 0 : i32
    %81 = arith.cmpi ne, %80, %c0_i32_59 : i32
    scf.if %81 {
      %c0_60 = arith.constant 0 : index
      %c0_61 = arith.constant 0 : index
      %82 = vector.load %arg9[%c0_60, %c0_61] : memref<8x32xf32, #tpu.memory_space<vmem>>, vector<8x32xf32>
      %c0_62 = arith.constant 0 : index
      %c0_63 = arith.constant 0 : index
      %c0_64 = arith.constant 0 : index
      %83 = vector.load %arg8[%c0_62, %c0_63, %c0_64] : memref<1x8x32xf32, #tpu.memory_space<vmem>>, vector<1x8x32xf32>
      %84 = vector.shape_cast %83 : vector<1x8x32xf32> to vector<8x32xf32>
      %85 = vector.shape_cast %82 : vector<8x32xf32> to vector<1x8x32xf32>
      tpu.vector_store %arg8[%c0_62, %c0_63, %c0_64], %85 {strides = array<i32>} : memref<1x8x32xf32, #tpu.memory_space<vmem>>, vector<1x8x32xf32>,
    } else {
    }
    return
  }
  func.func @transform_0(%arg0: i32, %arg1: i32) -> (i32, i32, i32) {
    %c0_i32 = arith.constant 0 : i32
    %c0_i32_0 = arith.constant 0 : i32
    %c0_i32_1 = arith.constant 0 : i32
    return %arg0, %c0_i32, %c0_i32_0 : i32, i32, i32
  }
  func.func @transform_1(%arg0: i32, %arg1: i32) -> (i32, i32, i32) {
    %c0_i32 = arith.constant 0 : i32
    %c0_i32_0 = arith.constant 0 : i32
    %c0_i32_1 = arith.constant 0 : i32
    return %arg1, %c0_i32, %c0_i32_0 : i32, i32, i32
  }
  func.func @transform_2(%arg0: i32, %arg1: i32) -> (i32, i32, i32) {
    %c0_i32 = arith.constant 0 : i32
    %c0_i32_0 = arith.constant 0 : i32
    %c0_i32_1 = arith.constant 0 : i32
    return %arg1, %c0_i32, %c0_i32_0 : i32, i32, i32
  }
  func.func @transform_3(%arg0: i32, %arg1: i32) -> (i32, i32, i32) {
    %c0_i32 = arith.constant 0 : i32
    %c0_i32_0 = arith.constant 0 : i32
    %c0_i32_1 = arith.constant 0 : i32
    return %arg1, %c0_i32, %c0_i32_0 : i32, i32, i32
  }
  func.func @transform_4(%arg0: i32, %arg1: i32) -> (i32, i32, i32) {
    %c0_i32 = arith.constant 0 : i32
    %c0_i32_0 = arith.constant 0 : i32
    %c0_i32_1 = arith.constant 0 : i32
    return %arg1, %c0_i32, %c0_i32_0 : i32, i32, i32
  }
  func.func @transform_5(%arg0: i32, %arg1: i32) -> (i32, i32, i32, i32) {
    %c0_i32 = arith.constant 0 : i32
    %c0_i32_0 = arith.constant 0 : i32
    %c0_i32_1 = arith.constant 0 : i32
    %c0_i32_2 = arith.constant 0 : i32
    return %c0_i32, %arg1, %c0_i32_0, %c0_i32_1 : i32, i32, i32, i32
  }
  func.func @transform_6(%arg0: i32, %arg1: i32) -> (i32, i32, i32) {
    %c0_i32 = arith.constant 0 : i32
    %c0_i32_0 = arith.constant 0 : i32
    %c0_i32_1 = arith.constant 0 : i32
    return %arg0, %c0_i32, %c0_i32_0 : i32, i32, i32
  }
}

</mosaic_0001>

<llo_original>
// kernel: tpu_custom_call.1
$region0: #{tpu_custom_call.1}
  #allocation0 [shape = 'u32[]', space=smem, size = 0x4, offset = 0x4, fixed_abs, tag = 'smem constant byte address 0x4 - core index']
  #allocation1 [shape = 'u32[72,128]{1,0:T(1,128)}', space=vmem, size = 0x9000, scoped, tag = 'internal scratch']
  #allocation2 [shape = 'f32[8,32]{1,0:T(8,128)}', space=vmem, size = 0x1000, scoped, tag = 'scratch operand']
  %s0 = inlined_call_operand.vmem [shape: bf16[2,8,32], index: 0, kind: input, shape index: {}]
  %s1 = inlined_call_operand.vmem [shape: bf16[4,32,8], index: 1, kind: input, shape index: {}]
  %s2 = inlined_call_operand.vmem [shape: bf16[4,32,8], index: 2, kind: input, shape index: {}]
  %s3 = inlined_call_operand.vmem [shape: bf16[4,32,8], index: 3, kind: input, shape index: {}]
  %s4 = inlined_call_operand.vmem [shape: bf16[4,8,32], index: 4, kind: input, shape index: {}]
  %s5 = inlined_call_operand.vmem [shape: f32[1,4,8,8], index: 5, kind: input, shape index: {}]
  %s6 = inlined_call_operand.hbm [shape: f32[2,8,32], index: 6, kind: output, shape index: {}]
  %s7 = sld [smem:[#allocation0]]
  $region65: #{tpu_custom_call.1} parent=0
    _
  %s9 = ssub.s32 1, %s7
  %s10 = scalar_select 0, %s9, %s7
  $region1: #{tpu_custom_call.1} parent=0
    #allocation3 [shape = 'u8[8192]{0}', space=vmem, size = 0x2000, scoped, tag = 'output window, operand 0']
    #allocation4 [shape = 's32[2]{0}', space=sflag, size = 0x8, scoped, tag = 'scoped memory for tpu_custom_call.1']
    %11 = vsyncpa [#allocation4], 0
    %s12 = scalar_lea.sflag [#allocation4], 1
    %13 = vsyncpa %s12, 0
    loop: start=0, step=1, limit=6
    $region2: #{tpu_custom_call.1} parent=1 // loop_pre_header
      _
    $region3: #{tpu_custom_call.1} parent=1 // loop_header
      %s15 = sphi 0, %s19
      %p16 = scmp.ge.s32.totalorder %s15, 6
      %s22 = sphi 0, %s34
      %s23 = sphi 0, %s30
      %s24 = sphi 0, %s22
      %s25 = sphi 0, %s23
      %s26 = sphi 0, %s24
      %s27 = sphi 0, %s25
      %s37 = sphi 0, %s39
      %s40 = sphi 0, %s37
      %s41 = sphi 0, %s40
      %s57 = sphi 0, %s41
      %s63 = sphi 0, %s65
      %s66 = sphi 0, %s63
      %s67 = sphi 0, %s66
      %s83 = sphi 0, %s67
      %s89 = sphi 0, %s91
      %s92 = sphi 0, %s89
      %s93 = sphi 0, %s92
      %s109 = sphi 0, %s93
      %s115 = sphi 0, %s117
      %s118 = sphi 0, %s115
      %s119 = sphi 0, %s118
      %s135 = sphi 0, %s119
      %s141 = sphi 0, %s143
      %s144 = sphi 0, %s141
      %s145 = sphi 0, %s144
      %s161 = sphi 0, %s145
      %s167 = sphi 0, %s169
      %s170 = sphi 0, %s167
      %s171 = sphi 0, %s170
      %s187 = sphi 0, %s171
      %s193 = sphi 0, %s195
      %s196 = sphi 0, %s193
      %s197 = sphi 0, %s196
      %s213 = sphi 0, %s197
    $region4: #{tpu_custom_call.1} parent=1 // loop_header_branch
      %18 = sbr.rel (%p16) target = $region8
    $region5: #{tpu_custom_call.1} parent=1 // loop_body
      %s20 = ssub.s32 %s15, 1
      %s21 = ssub.s32 %s15, 2
      %s28 = sadd.s32 1, %s23
      %p29 = scmp.ge.s32.totalorder %s28, 2
      %s30 = scalar_select %p29, 0, %s28
      %s31 = sadd.s32 1, %s22
      %s32 = scalar_select %p29, %s31, %s22
      %p33 = scmp.ge.s32.totalorder %s32, 2
      %s34 = scalar_select %p33, 0, %s32
      %s35 = ssub.s32 %s22, %s34
      %p36 = scmp.eq.s32.totalorder %s35, 0
      %s38 = sadd.s32 %s37, 1
      %s39 = scalar_select %p36, %s37, %s38
      %p42 = pneg %p36
      %p43 = scmp.eq.s32.totalorder %s15, 3
      %p44 = por %p42, %p43
      %p45 = scmp.ne.s32.totalorder %s37, %s40
      %p46 = scmp.eq.s32.totalorder %s15, 0
      %p47 = por %p45, %p46
      %p48 = scmp.ne.s32.totalorder %s37, %s40
      %p49 = scmp.eq.s32.totalorder %s20, 3
      %p50 = por %p48, %p49
      %p51 = scmp.ne.s32.totalorder %s40, %s41
      %p52 = scmp.eq.s32.totalorder %s20, 0
      %p53 = por %p51, %p52
      %p54 = scmp.ne.s32.totalorder %s40, %s41
      %p55 = scmp.eq.s32.totalorder %s21, 3
      %p56 = por %p54, %p55
      %p58 = scmp.ne.s32.totalorder %s41, %s57
      %p59 = scmp.eq.s32.totalorder %s21, 0
      %p60 = por %p58, %p59
      %s61 = ssub.s32 %s23, %s30
      %p62 = scmp.eq.s32.totalorder %s61, 0
      %s64 = sadd.s32 %s63, 1
      %s65 = scalar_select %p62, %s63, %s64
      %p68 = pneg %p62
      %p69 = scmp.eq.s32.totalorder %s15, 3
      %p70 = por %p68, %p69
      %p71 = scmp.ne.s32.totalorder %s63, %s66
      %p72 = scmp.eq.s32.totalorder %s15, 0
      %p73 = por %p71, %p72
      %p74 = scmp.ne.s32.totalorder %s63, %s66
      %p75 = scmp.eq.s32.totalorder %s20, 3
      %p76 = por %p74, %p75
      %p77 = scmp.ne.s32.totalorder %s66, %s67
      %p78 = scmp.eq.s32.totalorder %s20, 0
      %p79 = por %p77, %p78
      %p80 = scmp.ne.s32.totalorder %s66, %s67
      %p81 = scmp.eq.s32.totalorder %s21, 3
      %p82 = por %p80, %p81
      %p84 = scmp.ne.s32.totalorder %s67, %s83
      %p85 = scmp.eq.s32.totalorder %s21, 0
      %p86 = por %p84, %p85
      %s87 = ssub.s32 %s23, %s30
      %p88 = scmp.eq.s32.totalorder %s87, 0
      %s90 = sadd.s32 %s89, 1
      %s91 = scalar_select %p88, %s89, %s90
      %p94 = pneg %p88
      %p95 = scmp.eq.s32.totalorder %s15, 3
      %p96 = por %p94, %p95
      %p97 = scmp.ne.s32.totalorder %s89, %s92
      %p98 = scmp.eq.s32.totalorder %s15, 0
      %p99 = por %p97, %p98
      %p100 = scmp.ne.s32.totalorder %s89, %s92
      %p101 = scmp.eq.s32.totalorder %s20, 3
      %p102 = por %p100, %p101
      %p103 = scmp.ne.s32.totalorder %s92, %s93
      %p104 = scmp.eq.s32.totalorder %s20, 0
      %p105 = por %p103, %p104
      %p106 = scmp.ne.s32.totalorder %s92, %s93
      %p107 = scmp.eq.s32.totalorder %s21, 3
      %p108 = por %p106, %p107
      %p110 = scmp.ne.s32.totalorder %s93, %s109
      %p111 = scmp.eq.s32.totalorder %s21, 0
      %p112 = por %p110, %p111
      %s113 = ssub.s32 %s23, %s30
      %p114 = scmp.eq.s32.totalorder %s113, 0
      %s116 = sadd.s32 %s115, 1
      %s117 = scalar_select %p114, %s115, %s116
      %p120 = pneg %p114
      %p121 = scmp.eq.s32.totalorder %s15, 3
      %p122 = por %p120, %p121
      %p123 = scmp.ne.s32.totalorder %s115, %s118
      %p124 = scmp.eq.s32.totalorder %s15, 0
      %p125 = por %p123, %p124
      %p126 = scmp.ne.s32.totalorder %s115, %s118
      %p127 = scmp.eq.s32.totalorder %s20, 3
      %p128 = por %p126, %p127
      %p129 = scmp.ne.s32.totalorder %s118, %s119
      %p130 = scmp.eq.s32.totalorder %s20, 0
      %p131 = por %p129, %p130
      %p132 = scmp.ne.s32.totalorder %s118, %s119
      %p133 = scmp.eq.s32.totalorder %s21, 3
      %p134 = por %p132, %p133
      %p136 = scmp.ne.s32.totalorder %s119, %s135
      %p137 = scmp.eq.s32.totalorder %s21, 0
      %p138 = por %p136, %p137
      %s139 = ssub.s32 %s23, %s30
      %p140 = scmp.eq.s32.totalorder %s139, 0
      %s142 = sadd.s32 %s141, 1
      %s143 = scalar_select %p140, %s141, %s142
      %p146 = pneg %p140
      %p147 = scmp.eq.s32.totalorder %s15, 3
      %p148 = por %p146, %p147
      %p149 = scmp.ne.s32.totalorder %s141, %s144
      %p150 = scmp.eq.s32.totalorder %s15, 0
      %p151 = por %p149, %p150
      %p152 = scmp.ne.s32.totalorder %s141, %s144
      %p153 = scmp.eq.s32.totalorder %s20, 3
      %p154 = por %p152, %p153
      %p155 = scmp.ne.s32.totalorder %s144, %s145
      %p156 = scmp.eq.s32.totalorder %s20, 0
      %p157 = por %p155, %p156
      %p158 = scmp.ne.s32.totalorder %s144, %s145
      %p159 = scmp.eq.s32.totalorder %s21, 3
      %p160 = por %p158, %p159
      %p162 = scmp.ne.s32.totalorder %s145, %s161
      %p163 = scmp.eq.s32.totalorder %s21, 0
      %p164 = por %p162, %p163
      %s165 = ssub.s32 %s23, %s30
      %p166 = scmp.eq.s32.totalorder %s165, 0
      %s168 = sadd.s32 %s167, 1
      %s169 = scalar_select %p166, %s167, %s168
      %p172 = pneg %p166
      %p173 = scmp.eq.s32.totalorder %s15, 3
      %p174 = por %p172, %p173
      %p175 = scmp.ne.s32.totalorder %s167, %s170
      %p176 = scmp.eq.s32.totalorder %s15, 0
      %p177 = por %p175, %p176
      %p178 = scmp.ne.s32.totalorder %s167, %s170
      %p179 = scmp.eq.s32.totalorder %s20, 3
      %p180 = por %p178, %p179
      %p181 = scmp.ne.s32.totalorder %s170, %s171
      %p182 = scmp.eq.s32.totalorder %s20, 0
      %p183 = por %p181, %p182
      %p184 = scmp.ne.s32.totalorder %s170, %s171
      %p185 = scmp.eq.s32.totalorder %s21, 3
      %p186 = por %p184, %p185
      %p188 = scmp.ne.s32.totalorder %s171, %s187
      %p189 = scmp.eq.s32.totalorder %s21, 0
      %p190 = por %p188, %p189
      %s191 = ssub.s32 %s22, %s34
      %p192 = scmp.eq.s32.totalorder %s191, 0
      %s194 = sadd.s32 %s193, 1
      %s195 = scalar_select %p192, %s193, %s194
      %p198 = pneg %p192
      %p199 = scmp.eq.s32.totalorder %s15, 3
      %p200 = por %p198, %p199
      %p201 = scmp.ne.s32.totalorder %s193, %s196
      %p202 = scmp.eq.s32.totalorder %s15, 0
      %p203 = por %p201, %p202
      %p204 = scmp.ne.s32.totalorder %s193, %s196
      %p205 = scmp.eq.s32.totalorder %s20, 3
      %p206 = por %p204, %p205
      %p207 = scmp.ne.s32.totalorder %s196, %s197
      %p208 = scmp.eq.s32.totalorder %s20, 0
      %p209 = por %p207, %p208
      %p210 = scmp.ne.s32.totalorder %s196, %s197
      %p211 = scmp.eq.s32.totalorder %s21, 3
      %p212 = por %p210, %p211
      %p214 = scmp.ne.s32.totalorder %s197, %s213
      %p215 = scmp.eq.s32.totalorder %s21, 0
      %p216 = por %p214, %p215
      %p217 = scmp.le.s32.totalorder 1, %s15
      %p218 = scmp.lt.s32.totalorder %s15, 5
      %p219 = pnand %p217, %p218
      %p220 = pneg %p219
      // Predicated region
      $region9: #{tpu_custom_call.1} parent=5 // pred_check
        _
      $region10: #{tpu_custom_call.1} parent=5 // pred_check_branch
        %222 = sbr.rel (%p219) target = $region12
      $region11: #{tpu_custom_call.1} parent=5 // pred_region
        %s223 = ssub.s32 %s15, 1
      $region12: #{tpu_custom_call.1} parent=5 // pred_fallthru
        _
      %p224 = scmp.lt.s32.totalorder %s15, 4
      // Predicated region
      $region13: #{tpu_custom_call.1} parent=5 // pred_check
        %p225 = pneg %p224
      $region14: #{tpu_custom_call.1} parent=5 // pred_check_branch
        %227 = sbr.rel (%p225) target = $region16
      $region15: #{tpu_custom_call.1} parent=5 // pred_region
        // Predicated region
        $region17: #{tpu_custom_call.1} parent=15 // pred_check
          %p228 = pneg %p47
        $region18: #{tpu_custom_call.1} parent=15 // pred_check_branch
          %230 = sbr.rel (%p228) target = $region20
        $region19: #{tpu_custom_call.1} parent=15 // pred_region
          %p231 = scmp.lt.s32.totalorder %s22, 1
          %s232 = scalar_select %p231, %s22, 1
          %s233 = smul.addr %s232, 4
          %s234 = scalar_lea.vmem %s0, %s233
        $region20: #{tpu_custom_call.1} parent=15 // pred_fallthru
          _
        // Predicated region
        $region21: #{tpu_custom_call.1} parent=15 // pred_check
          %p235 = pneg %p73
        $region22: #{tpu_custom_call.1} parent=15 // pred_check_branch
          %237 = sbr.rel (%p235) target = $region24
        $region23: #{tpu_custom_call.1} parent=15 // pred_region
          %s238 = smul.u32 2, %s23
          %p239 = scmp.lt.s32.totalorder %s238, 3
          %s240 = scalar_select %p239, %s238, 3
          %s241 = smul.addr %s240, 4
          %s242 = smul.addr %s241, 4
          %s243 = scalar_lea.vmem %s1, %s242
          %s244 = smul.u32 2, %s23
        $region24: #{tpu_custom_call.1} parent=15 // pred_fallthru
          _
        // Predicated region
        $region25: #{tpu_custom_call.1} parent=15 // pred_check
          %p245 = pneg %p99
        $region26: #{tpu_custom_call.1} parent=15 // pred_check_branch
          %247 = sbr.rel (%p245) target = $region28
        $region27: #{tpu_custom_call.1} parent=15 // pred_region
          %s248 = smul.u32 2, %s23
          %p249 = scmp.lt.s32.totalorder %s248, 3
          %s250 = scalar_select %p249, %s248, 3
          %s251 = smul.addr %s250, 4
          %s252 = smul.addr %s251, 4
          %s253 = scalar_lea.vmem %s2, %s252
          %s254 = smul.u32 2, %s23
        $region28: #{tpu_custom_call.1} parent=15 // pred_fallthru
          _
        // Predicated region
        $region29: #{tpu_custom_call.1} parent=15 // pred_check
          %p255 = pneg %p125
        $region30: #{tpu_custom_call.1} parent=15 // pred_check_branch
          %257 = sbr.rel (%p255) target = $region32
        $region31: #{tpu_custom_call.1} parent=15 // pred_region
          %s258 = smul.u32 2, %s23
          %p259 = scmp.lt.s32.totalorder %s258, 3
          %s260 = scalar_select %p259, %s258, 3
          %s261 = smul.addr %s260, 4
          %s262 = smul.addr %s261, 4
          %s263 = scalar_lea.vmem %s3, %s262
          %s264 = smul.u32 2, %s23
        $region32: #{tpu_custom_call.1} parent=15 // pred_fallthru
          _
        // Predicated region
        $region33: #{tpu_custom_call.1} parent=15 // pred_check
          %p265 = pneg %p151
        $region34: #{tpu_custom_call.1} parent=15 // pred_check_branch
          %267 = sbr.rel (%p265) target = $region36
        $region35: #{tpu_custom_call.1} parent=15 // pred_region
          %s268 = smul.u32 2, %s23
          %p269 = scmp.lt.s32.totalorder %s268, 3
          %s270 = scalar_select %p269, %s268, 3
          %s271 = smul.addr %s270, 4
          %s272 = scalar_lea.vmem %s4, %s271
          %s273 = smul.u32 2, %s23
        $region36: #{tpu_custom_call.1} parent=15 // pred_fallthru
          _
        // Predicated region
        $region37: #{tpu_custom_call.1} parent=15 // pred_check
          %p274 = pneg %p177
        $region38: #{tpu_custom_call.1} parent=15 // pred_check_branch
          %276 = sbr.rel (%p274) target = $region40
        $region39: #{tpu_custom_call.1} parent=15 // pred_region
          %s277 = smul.u32 2, %s23
          %p278 = scmp.lt.s32.totalorder %s277, 3
          %s279 = scalar_select %p278, %s277, 3
          %s280 = smul.addr %s279, 8
          %s281 = scalar_lea.vmem %s5, %s280
          %s282 = smul.u32 2, %s23
        $region40: #{tpu_custom_call.1} parent=15 // pred_fallthru
          _
      $region16: #{tpu_custom_call.1} parent=5 // pred_fallthru
        _
      %p283 = scmp.le.s32.totalorder 1, %s15
      %p284 = scmp.lt.s32.totalorder %s15, 5
      %p285 = pnand %p283, %p284
      %p286 = pneg %p285
      // Predicated region
      $region41: #{tpu_custom_call.1} parent=5 // pred_check
        _
      $region42: #{tpu_custom_call.1} parent=5 // pred_check_branch
        %288 = sbr.rel (%p285) target = $region44
      $region43: #{tpu_custom_call.1} parent=5 // pred_region
        %s289 = ssub.s32 %s15, 1
        %p290 = scmp.lt.s32.totalorder %s24, 1
        %s291 = scalar_select %p290, %s24, 1
        %s292 = smul.addr %s291, 4
        %s293 = scalar_lea.vmem %s0, %s292
        %p294 = pneg %p53
        %p295 = pneg %p50
        %s296 = smul.u32 2, %s25
        %p297 = scmp.lt.s32.totalorder %s296, 3
        %s298 = scalar_select %p297, %s296, 3
        %s299 = smul.addr %s298, 4
        %s300 = smul.addr %s299, 4
        %s301 = scalar_lea.vmem %s1, %s300
        %p302 = pneg %p79
        %p303 = pneg %p76
        %s304 = smul.u32 2, %s25
        %p305 = scmp.lt.s32.totalorder %s304, 3
        %s306 = scalar_select %p305, %s304, 3
        %s307 = smul.addr %s306, 4
        %s308 = smul.addr %s307, 4
        %s309 = scalar_lea.vmem %s2, %s308
        %p310 = pneg %p105
        %p311 = pneg %p102
        %s312 = smul.u32 2, %s25
        %p313 = scmp.lt.s32.totalorder %s312, 3
        %s314 = scalar_select %p313, %s312, 3
        %s315 = smul.addr %s314, 4
        %s316 = smul.addr %s315, 4
        %s317 = scalar_lea.vmem %s3, %s316
        %p318 = pneg %p131
        %p319 = pneg %p128
        %s320 = smul.u32 2, %s25
        %p321 = scmp.lt.s32.totalorder %s320, 3
        %s322 = scalar_select %p321, %s320, 3
        %s323 = smul.addr %s322, 4
        %s324 = scalar_lea.vmem %s4, %s323
        %p325 = pneg %p157
        %p326 = pneg %p154
        %s327 = smul.u32 2, %s25
        %p328 = scmp.lt.s32.totalorder %s327, 3
        %s329 = scalar_select %p328, %s327, 3
        %s330 = smul.addr %s329, 8
        %s331 = scalar_lea.vmem %s5, %s330
        %p332 = pneg %p183
        %p333 = pneg %p180
        %p334 = pneg %p209
        %p335 = pneg %p206
        %s336 = sand.u32 %s196, 1
        %s337 = scalar_lea.sflag [#allocation4], %s336
        %s338 = sand.u32 %s196, 1
        %s339 = smul.addr %s338, 8
        %s340 = scalar_lea.vmem [#allocation3], %s339
        %p341 = scmp.lt.s32.totalorder %s24, 1
        %s342 = scalar_select %p341, %s24, 1
        %s343 = smul.addr %s342, 4
        %s344 = scalar_lea.vmem %s0, %s343
        %s345 = smul.u32 2, %s25
        %p346 = scmp.lt.s32.totalorder %s345, 3
        %s347 = scalar_select %p346, %s345, 3
        %s348 = smul.addr %s347, 4
        %s349 = smul.addr %s348, 4
        %s350 = scalar_lea.vmem %s1, %s349
        %s351 = smul.u32 2, %s25
        %s352 = smul.u32 2, %s25
        %p353 = scmp.lt.s32.totalorder %s352, 3
        %s354 = scalar_select %p353, %s352, 3
        %s355 = smul.addr %s354, 4
        %s356 = smul.addr %s355, 4
        %s357 = scalar_lea.vmem %s2, %s356
        %s358 = smul.u32 2, %s25
        %s359 = smul.u32 2, %s25
        %p360 = scmp.lt.s32.totalorder %s359, 3
        %s361 = scalar_select %p360, %s359, 3
        %s362 = smul.addr %s361, 4
        %s363 = smul.addr %s362, 4
        %s364 = scalar_lea.vmem %s3, %s363
        %s365 = smul.u32 2, %s25
        %s366 = smul.u32 2, %s25
        %p367 = scmp.lt.s32.totalorder %s366, 3
        %s368 = scalar_select %p367, %s366, 3
        %s369 = smul.addr %s368, 4
        %s370 = scalar_lea.vmem %s4, %s369
        %s371 = smul.u32 2, %s25
        %s372 = smul.u32 2, %s25
        %p373 = scmp.lt.s32.totalorder %s372, 3
        %s374 = scalar_select %p373, %s372, 3
        %s375 = smul.addr %s374, 8
        %s376 = scalar_lea.vmem %s5, %s375
        %s377 = smul.u32 2, %s25
        %p379 = scmp.eq.s32.totalorder %s25, 0
        // Predicated region
        $region45: #{tpu_custom_call.1} parent=43 // pred_check
          %p380 = pneg %p379
        $region46: #{tpu_custom_call.1} parent=43 // pred_check_branch
          %382 = sbr.rel (%p380) target = $region48
        $region47: #{tpu_custom_call.1} parent=43 // pred_region
          %vm383 = vcmask 261120
          %384 = vst.msk [vmem:[#allocation2] sm:$0xff] %vm383, 0.0
        $region48: #{tpu_custom_call.1} parent=43 // pred_fallthru
          _
        %v385 = vld [vmem:[%s344] sm:$0xf]
        %v386 = vld [vmem:[%s350] sm:$0xf]
        %v387 = vld [vmem:[%s350 + $0x4] sm:$0xf]
        %v388 = vld [vmem:[%s350 + $0x8] sm:$0xf]
        %v389 = vld [vmem:[%s350 + $0xc] sm:$0xf]
        %v390 = vld [vmem:[%s357] sm:$0xf]
        %v391 = vld [vmem:[%s357 + $0x4] sm:$0xf]
        %v392 = vld [vmem:[%s357 + $0x8] sm:$0xf]
        %v393 = vld [vmem:[%s357 + $0xc] sm:$0xf]
        %v394 = vld [vmem:[%s364] sm:$0xf]
        %v395 = vld [vmem:[%s364 + $0x4] sm:$0xf]
        %v396 = vld [vmem:[%s364 + $0x8] sm:$0xf]
        %v397 = vld [vmem:[%s364 + $0xc] sm:$0xf]
        %v398 = vld [vmem:[%s370] sm:$0xf]
        %v403 = vunpack.c.l.b16 %v386
        %v404 = vunpack.c.l.b16 %v387
        %v405 = vunpack.c.l.b16 %v388
        %v406 = vunpack.c.l.b16 %v389
        %v407 = vpack.c.b16 %v404, %v403
        %v408 = vpack.c.b16 %v406, %v405
        %vm411 = vcmask 261120
        %v413 = vsel %vm411, %v385, 0
        %415 = vmatpush.bf16.msra.mxu0 0
        %416 = vmatpush.bf16.msra.mxu0 0
        %417 = vmatpush.bf16.msra.mxu0 0
        %418 = vmatpush.bf16.msra.mxu0 0
        %419 = vmatpush.bf16.msra.mxu0 0
        %420 = vmatpush.bf16.msra.mxu0 0
        %421 = vmatpush.bf16.msra.mxu0 %v408
        %422 = vmatpush.bf16.msra.mxu0 %v407
        %423 = vmatmul.bf16.gmra.mxu0 %v413
        %v424 = vpop.f32.mrf.mxu0
        %v425 = vadd.f32 0.0, %v424
        %v426 = vpop.f32.mrf.mxu0
        %427 = vdwg.mxu0
        %v428 = vmul.f32 %v425, 0.5
        %v429 = vpack.c.bf16 %v428, %v428
        %v434 = vunpack.c.l.b16 %v390
        %v435 = vunpack.c.l.b16 %v391
        %v436 = vunpack.c.l.b16 %v392
        %v437 = vunpack.c.l.b16 %v393
        %v438 = vpack.c.b16 %v435, %v434
        %v439 = vpack.c.b16 %v437, %v436
        %442 = vmatpush.bf16.msra.mxu0 0
        %443 = vmatpush.bf16.msra.mxu0 0
        %444 = vmatpush.bf16.msra.mxu0 0
        %445 = vmatpush.bf16.msra.mxu0 0
        %446 = vmatpush.bf16.msra.mxu0 0
        %447 = vmatpush.bf16.msra.mxu0 0
        %448 = vmatpush.bf16.msra.mxu0 %v439
        %449 = vmatpush.bf16.msra.mxu0 %v438
        %450 = vmatmul.bf16.gmra.mxu0 %v413
        %v451 = vpop.f32.mrf.mxu0
        %v452 = vadd.f32 0.0, %v451
        %v453 = vpop.f32.mrf.mxu0
        %454 = vdwg.mxu0
        %v455 = vpack.c.bf16 %v452, %v452
        %v460 = vunpack.c.l.b16 %v394
        %v461 = vunpack.c.l.b16 %v395
        %v462 = vunpack.c.l.b16 %v396
        %v463 = vunpack.c.l.b16 %v397
        %v464 = vpack.c.b16 %v461, %v460
        %v465 = vpack.c.b16 %v463, %v462
        %468 = vmatpush.bf16.msra.mxu0 0
        %469 = vmatpush.bf16.msra.mxu0 0
        %470 = vmatpush.bf16.msra.mxu0 0
        %471 = vmatpush.bf16.msra.mxu0 0
        %472 = vmatpush.bf16.msra.mxu0 0
        %473 = vmatpush.bf16.msra.mxu0 0
        %474 = vmatpush.bf16.msra.mxu0 %v465
        %475 = vmatpush.bf16.msra.mxu0 %v464
        %476 = vmatmul.bf16.gmra.mxu0 %v413
        %v477 = vpop.f32.mrf.mxu0
        %v478 = vadd.f32 0.0, %v477
        %v479 = vpop.f32.mrf.mxu0
        %480 = vdwg.mxu0
        %v481 = vpack.c.bf16 %v478, %v478
        %v482 = vld [vmem:[%s376] sm:$0xff]
        %vm483 = vcmask 64512
        %v485 = vsel %vm483, %v429, 0
        %v488 = vsel %vm483, %v455, 0
        %490 = vmatpush.bf16.xpose.msra.mxu0 0
        %491 = vmatpush.bf16.xpose.msra.mxu0 0
        %492 = vmatpush.bf16.xpose.msra.mxu0 0
        %493 = vmatpush.bf16.xpose.msra.mxu0 0
        %494 = vmatpush.bf16.xpose.msra.mxu0 0
        %495 = vmatpush.bf16.xpose.msra.mxu0 0
        %496 = vmatpush.bf16.xpose.msra.mxu0 0
        %497 = vmatpush.bf16.xpose.msra.mxu0 %v488
        %498 = vmatmul.bf16.gmra.mxu0 %v485
        %v499 = vpop.f32.mrf.mxu0
        %v500 = vadd.f32 %v482, %v499
        %v501 = vpop.f32.mrf.mxu0
        %502 = vdwg.mxu0
        %v503 = vsel %vm483, %v500, -inf
        %504 = vmax.xlane.f32.xlu0 %v503
        %v505 = vpop.xlane.xlu0 %504
        %v506 = vsub.f32 %v500, %v505
        %v507 = vmul.f32 %v506, 1.442695
        %v508 = vpow.pop %v507
        %v509 = vsel %vm483, %v508, 0.0
        %510 = vadd.xlane.f32.xlu0 %v509
        %v511 = vpop.xlane.xlu0 %510
        %v512 = vrcp.pop %v511
        %v513 = vmul.f32 %v508, %v512
        %v514 = vpack.c.bf16 %v513, %v513
        %v516 = vsel %vm483, %v514, 0
        %vm518 = vcmask 1043456
        %v520 = vsel %vm518, %v481, 0
        %522 = vmatpush.bf16.msra.mxu0 0
        %523 = vmatpush.bf16.msra.mxu0 0
        %524 = vmatpush.bf16.msra.mxu0 0
        %525 = vmatpush.bf16.msra.mxu0 0
        %526 = vmatpush.bf16.msra.mxu0 0
        %527 = vmatpush.bf16.msra.mxu0 0
        %528 = vmatpush.bf16.msra.mxu0 0
        %529 = vmatpush.bf16.msra.mxu0 %v520
        %530 = vmatmul.bf16.gmra.mxu0 %v516
        %v531 = vpop.f32.mrf.mxu0
        %v532 = vadd.f32 0.0, %v531
        %v533 = vpop.f32.mrf.mxu0
        %534 = vdwg.mxu0
        %v535 = vld [vmem:[#allocation2] sm:$0xff]
        %v536 = vpack.c.bf16 %v532, %v532
        %v538 = vsel %vm483, %v536, 0
        %v541 = vsel %vm518, %v398, 0
        %543 = vmatpush.bf16.msra.mxu0 0
        %544 = vmatpush.bf16.msra.mxu0 0
        %545 = vmatpush.bf16.msra.mxu0 0
        %546 = vmatpush.bf16.msra.mxu0 0
        %547 = vmatpush.bf16.msra.mxu0 0
        %548 = vmatpush.bf16.msra.mxu0 0
        %549 = vmatpush.bf16.msra.mxu0 0
        %550 = vmatpush.bf16.msra.mxu0 %v541
        %551 = vmatmul.bf16.gmra.mxu0 %v538
        %v552 = vpop.f32.mrf.mxu0
        %v553 = vadd.f32 0.0, %v552
        %v554 = vpop.f32.mrf.mxu0
        %555 = vdwg.mxu0
        %v556 = vadd.f32 %v535, %v553
        %557 = vst.msk [vmem:[#allocation2] sm:$0xff] %vm411, %v556
        %s558 = scalar_lea.vmem %s350, 16
        %v559 = vld [vmem:[%s558] sm:$0xf]
        %v560 = vld [vmem:[%s558 + $0x4] sm:$0xf]
        %v561 = vld [vmem:[%s558 + $0x8] sm:$0xf]
        %v562 = vld [vmem:[%s558 + $0xc] sm:$0xf]
        %s563 = scalar_lea.vmem %s357, 16
        %v564 = vld [vmem:[%s563] sm:$0xf]
        %v565 = vld [vmem:[%s563 + $0x4] sm:$0xf]
        %v566 = vld [vmem:[%s563 + $0x8] sm:$0xf]
        %v567 = vld [vmem:[%s563 + $0xc] sm:$0xf]
        %s568 = scalar_lea.vmem %s364, 16
        %v569 = vld [vmem:[%s568] sm:$0xf]
        %v570 = vld [vmem:[%s568 + $0x4] sm:$0xf]
        %v571 = vld [vmem:[%s568 + $0x8] sm:$0xf]
        %v572 = vld [vmem:[%s568 + $0xc] sm:$0xf]
        %s573 = scalar_lea.vmem %s370, 4
        %v574 = vld [vmem:[%s573] sm:$0xf]
        %v579 = vunpack.c.l.b16 %v559
        %v580 = vunpack.c.l.b16 %v560
        %v581 = vunpack.c.l.b16 %v561
        %v582 = vunpack.c.l.b16 %v562
        %v583 = vpack.c.b16 %v580, %v579
        %v584 = vpack.c.b16 %v582, %v581
        %587 = vmatpush.bf16.msra.mxu0 0
        %588 = vmatpush.bf16.msra.mxu0 0
        %589 = vmatpush.bf16.msra.mxu0 0
        %590 = vmatpush.bf16.msra.mxu0 0
        %591 = vmatpush.bf16.msra.mxu0 0
        %592 = vmatpush.bf16.msra.mxu0 0
        %593 = vmatpush.bf16.msra.mxu0 %v584
        %594 = vmatpush.bf16.msra.mxu0 %v583
        %595 = vmatmul.bf16.gmra.mxu0 %v413
        %v596 = vpop.f32.mrf.mxu0
        %v597 = vadd.f32 0.0, %v596
        %v598 = vpop.f32.mrf.mxu0
        %599 = vdwg.mxu0
        %v600 = vmul.f32 %v597, 0.5
        %v601 = vpack.c.bf16 %v600, %v600
        %v606 = vunpack.c.l.b16 %v564
        %v607 = vunpack.c.l.b16 %v565
        %v608 = vunpack.c.l.b16 %v566
        %v609 = vunpack.c.l.b16 %v567
        %v610 = vpack.c.b16 %v607, %v606
        %v611 = vpack.c.b16 %v609, %v608
        %614 = vmatpush.bf16.msra.mxu0 0
        %615 = vmatpush.bf16.msra.mxu0 0
        %616 = vmatpush.bf16.msra.mxu0 0
        %617 = vmatpush.bf16.msra.mxu0 0
        %618 = vmatpush.bf16.msra.mxu0 0
        %619 = vmatpush.bf16.msra.mxu0 0
        %620 = vmatpush.bf16.msra.mxu0 %v611
        %621 = vmatpush.bf16.msra.mxu0 %v610
        %622 = vmatmul.bf16.gmra.mxu0 %v413
        %v623 = vpop.f32.mrf.mxu0
        %v624 = vadd.f32 0.0, %v623
        %v625 = vpop.f32.mrf.mxu0
        %626 = vdwg.mxu0
        %v627 = vpack.c.bf16 %v624, %v624
        %v632 = vunpack.c.l.b16 %v569
        %v633 = vunpack.c.l.b16 %v570
        %v634 = vunpack.c.l.b16 %v571
        %v635 = vunpack.c.l.b16 %v572
        %v636 = vpack.c.b16 %v633, %v632
        %v637 = vpack.c.b16 %v635, %v634
        %640 = vmatpush.bf16.msra.mxu0 0
        %641 = vmatpush.bf16.msra.mxu0 0
        %642 = vmatpush.bf16.msra.mxu0 0
        %643 = vmatpush.bf16.msra.mxu0 0
        %644 = vmatpush.bf16.msra.mxu0 0
        %645 = vmatpush.bf16.msra.mxu0 0
        %646 = vmatpush.bf16.msra.mxu0 %v637
        %647 = vmatpush.bf16.msra.mxu0 %v636
        %648 = vmatmul.bf16.gmra.mxu0 %v413
        %v649 = vpop.f32.mrf.mxu0
        %v650 = vadd.f32 0.0, %v649
        %v651 = vpop.f32.mrf.mxu0
        %652 = vdwg.mxu0
        %v653 = vpack.c.bf16 %v650, %v650
        %s654 = scalar_lea.vmem %s376, 8
        %v655 = vld [vmem:[%s654] sm:$0xff]
        %v657 = vsel %vm483, %v601, 0
        %v660 = vsel %vm483, %v627, 0
        %662 = vmatpush.bf16.xpose.msra.mxu0 0
        %663 = vmatpush.bf16.xpose.msra.mxu0 0
        %664 = vmatpush.bf16.xpose.msra.mxu0 0
        %665 = vmatpush.bf16.xpose.msra.mxu0 0
        %666 = vmatpush.bf16.xpose.msra.mxu0 0
        %667 = vmatpush.bf16.xpose.msra.mxu0 0
        %668 = vmatpush.bf16.xpose.msra.mxu0 0
        %669 = vmatpush.bf16.xpose.msra.mxu0 %v660
        %670 = vmatmul.bf16.gmra.mxu0 %v657
        %v671 = vpop.f32.mrf.mxu0
        %v672 = vadd.f32 %v655, %v671
        %v673 = vpop.f32.mrf.mxu0
        %674 = vdwg.mxu0
        %v675 = vsel %vm483, %v672, -inf
        %676 = vmax.xlane.f32.xlu0 %v675
        %v677 = vpop.xlane.xlu0 %676
        %v678 = vsub.f32 %v672, %v677
        %v679 = vmul.f32 %v678, 1.442695
        %v680 = vpow.pop %v679
        %v681 = vsel %vm483, %v680, 0.0
        %682 = vadd.xlane.f32.xlu0 %v681
        %v683 = vpop.xlane.xlu0 %682
        %v684 = vrcp.pop %v683
        %v685 = vmul.f32 %v680, %v684
        %v686 = vpack.c.bf16 %v685, %v685
        %v688 = vsel %vm483, %v686, 0
        %v691 = vsel %vm518, %v653, 0
        %693 = vmatpush.bf16.msra.mxu0 0
        %694 = vmatpush.bf16.msra.mxu0 0
        %695 = vmatpush.bf16.msra.mxu0 0
        %696 = vmatpush.bf16.msra.mxu0 0
        %697 = vmatpush.bf16.msra.mxu0 0
        %698 = vmatpush.bf16.msra.mxu0 0
        %699 = vmatpush.bf16.msra.mxu0 0
        %700 = vmatpush.bf16.msra.mxu0 %v691
        %701 = vmatmul.bf16.gmra.mxu0 %v688
        %v702 = vpop.f32.mrf.mxu0
        %v703 = vadd.f32 0.0, %v702
        %v704 = vpop.f32.mrf.mxu0
        %705 = vdwg.mxu0
        %v706 = vld [vmem:[#allocation2] sm:$0xff]
        %v707 = vpack.c.bf16 %v703, %v703
        %v709 = vsel %vm483, %v707, 0
        %v712 = vsel %vm518, %v574, 0
        %714 = vmatpush.bf16.msra.mxu0 0
        %715 = vmatpush.bf16.msra.mxu0 0
        %716 = vmatpush.bf16.msra.mxu0 0
        %717 = vmatpush.bf16.msra.mxu0 0
        %718 = vmatpush.bf16.msra.mxu0 0
        %719 = vmatpush.bf16.msra.mxu0 0
        %720 = vmatpush.bf16.msra.mxu0 0
        %721 = vmatpush.bf16.msra.mxu0 %v712
        %722 = vmatmul.bf16.gmra.mxu0 %v709
        %v723 = vpop.f32.mrf.mxu0
        %v724 = vadd.f32 0.0, %v723
        %v725 = vpop.f32.mrf.mxu0
        %726 = vdwg.mxu0
        %v727 = vadd.f32 %v706, %v724
        %728 = vst.msk [vmem:[#allocation2] sm:$0xff] %vm411, %v727
        %p729 = scmp.eq.s32.totalorder %s25, 1
        // Predicated region
        $region49: #{tpu_custom_call.1} parent=43 // pred_check
          %p730 = pneg %p729
        $region50: #{tpu_custom_call.1} parent=43 // pred_check_branch
          %732 = sbr.rel (%p730) target = $region52
        $region51: #{tpu_custom_call.1} parent=43 // pred_region
          %v733 = vld [vmem:[#allocation2] sm:$0xff]
          %734 = vst.msk [vmem:[%s340] sm:$0xff] %vm411, %v733
        $region52: #{tpu_custom_call.1} parent=43 // pred_fallthru
          _
        %s735 = sand.u32 %s196, 1
        %s736 = scalar_lea.sflag [#allocation4], %s735
        %s737 = sand.u32 %s196, 1
        %s738 = smul.addr %s737, 8
        %s739 = scalar_lea.vmem [#allocation3], %s738
        // Predicated region
        $region53: #{tpu_custom_call.1} parent=43 // pred_check
          %p740 = pneg %p206
        $region54: #{tpu_custom_call.1} parent=43 // pred_check_branch
          %742 = sbr.rel (%p740) target = $region56
        $region55: #{tpu_custom_call.1} parent=43 // pred_region
          %744 = vsyncadd %s736, 0
          %s745 = smul.addr %s24, 8
          %s746 = scalar_lea.hbm %s6, %s745
          %s748 = sshll.u32 %s739, 4
          %s749 = int_to_ptr.vmem [resolvable:$true] %s748
          %s750 = sshll.u32 %s746, 4
          %s751 = int_to_ptr.hbm [resolvable:$true] %s750
          %753 = dma.vmem_to_hbm [thread:$0]  %s749, 128, %s751, %s736
        $region56: #{tpu_custom_call.1} parent=43 // pred_fallthru
          _
      $region44: #{tpu_custom_call.1} parent=5 // pred_fallthru
        _
      %p754 = scmp.le.s32.totalorder 2, %s15
      // Predicated region
      $region57: #{tpu_custom_call.1} parent=5 // pred_check
        %p755 = pneg %p754
      $region58: #{tpu_custom_call.1} parent=5 // pred_check_branch
        %757 = sbr.rel (%p755) target = $region60
      $region59: #{tpu_custom_call.1} parent=5 // pred_region
        %s758 = ssub.s32 %s15, 2
        // Predicated region
        $region61: #{tpu_custom_call.1} parent=59 // pred_check
          %p759 = pneg %p212
        $region62: #{tpu_custom_call.1} parent=59 // pred_check_branch
          %761 = sbr.rel (%p759) target = $region64
        $region63: #{tpu_custom_call.1} parent=59 // pred_region
          %s762 = sand.u32 %s197, 1
          %s763 = scalar_lea.sflag [#allocation4], %s762
          %s764 = sand.u32 %s197, 1
          %s765 = smul.addr %s764, 8
          %s766 = scalar_lea.vmem [#allocation3], %s765
          %768 = dma.done %s763, 128
        $region64: #{tpu_custom_call.1} parent=59 // pred_fallthru
          _
      $region60: #{tpu_custom_call.1} parent=5 // pred_fallthru
        _
    $region6: #{tpu_custom_call.1} parent=1 // loop_footer
      %s19 = sadd.s32 1, %s15
    $region7: #{tpu_custom_call.1} parent=1 // loop_footer_branch
      %14 = sbr.rel target = $region3
    $region8: #{tpu_custom_call.1} parent=1 // loop_exit
      _
    %769 = vsyncpa [#allocation4], 1
    %s770 = scalar_lea.sflag [#allocation4], 1
    %771 = vsyncpa %s770, 1

</llo_original>
